<compile_context>
chip_gen: v7x
topology: tpu7x:2x2x1
jax: 0.10.0
libtpu: 0.0.40
codegen_flags: <defaults>
</compile_context>

<pallas_src>
import functools
import math

import jax
import jax.numpy as jnp
from jax.experimental import pallas as pl
from jax.experimental.pallas import tpu as pltpu


def _attention_kernel(x_ref, w1_ref, b1_ref, w2_ref, b2_ref, o_ref):
    """One row-tile of  attn_2(tanh(attn_1(x))).

    x_ref : (tm, D)  bf16/f32  row tile of the flattened input
    w1_ref: (D, D)   bf16/f32  attn_1 weight, (in, out) layout
    b1_ref: (1, D)   f32       attn_1 bias
    w2_ref: (1, D)   f32       attn_2 weight as a row vector
    b2_ref: (1, 1)   f32       attn_2 bias
    o_ref : (tm, 1)  f32       attention logits for this tile
    """
    # MXU matmul with f32 accumulation; bias + tanh in f32.
    h = jnp.tanh(
        jnp.dot(x_ref[...], w1_ref[...], preferred_element_type=jnp.float32)
        + b1_ref[...]
    )
    # (D -> 1) projection as VPU multiply + lane reduction (MXU would waste
    # all but one result column and serialize behind the first matmul).
    logits = jnp.sum(h * w2_ref[...], axis=-1, keepdims=True) + b2_ref[...]
    o_ref[...] = logits.astype(o_ref.dtype)


def _round_up(a, b):
    return ((a + b - 1) // b) * b


@functools.partial(jax.jit, static_argnames=("tm", "use_bf16"))
def attention_forward(x, w1, b1, w2, b2, *, tm=512, use_bf16=True):
    """x: (B, S, D).  Returns (B, S, 1) attention logits.

    w1: (D, D) in (in, out) layout, b1: (D,), w2: (D,), b2: (1,).
    """
    B, S, D = x.shape
    N = B * S

    compute_dtype = jnp.bfloat16 if use_bf16 else jnp.float32
    itemsize = jnp.dtype(compute_dtype).itemsize
    row_align = 16 if use_bf16 else 8  # sublane packing of the x tile

    # Clamp the row tile to the (padded) problem size and keep it aligned.
    tm = max(row_align, _round_up(min(tm, _round_up(N, row_align)), row_align))
    n_pad = _round_up(N, tm)

    x2d = x.reshape(N, D).astype(compute_dtype)
    if n_pad != N:
        x2d = jnp.pad(x2d, ((0, n_pad - N), (0, 0)))

    w1c = w1.astype(compute_dtype)                     # (D, D), (in, out)
    b1_2d = b1.reshape(1, D).astype(jnp.float32)
    w2_row = w2.reshape(1, D).astype(jnp.float32)
    b2_2d = b2.reshape(1, 1).astype(jnp.float32)

    grid = (n_pad // tm,)

    # VMEM budget: x double-buffered, weights single-buffered, f32 h scratch,
    # output double-buffered; 2x headroom, clamped to stay safe on v7x (64MiB).
    vmem_bytes = (
        2 * tm * D * itemsize        # x tile (double-buffered)
        + D * D * itemsize           # W1 (single-buffered)
        + (2 * D + 1) * 4            # b1, w2, b2
        + tm * D * 4                 # f32 intermediate h
        + 2 * tm * 4                 # output tile (double-buffered)
    )
    vmem_limit = int(min(max(2 * vmem_bytes + (4 << 20), 32 << 20), 48 << 20))

    cost = pl.CostEstimate(
        flops=2 * n_pad * D * D + 2 * n_pad * D,
        transcendentals=n_pad * D,
        bytes_accessed=n_pad * D * itemsize
        + D * D * itemsize
        + (2 * D + 1) * 4
        + n_pad * 4,
    )

    single_buf = dict(pipeline_mode=pl.Buffered(buffer_count=1))

    out = pl.pallas_call(
        _attention_kernel,
        out_shape=jax.ShapeDtypeStruct((n_pad, 1), jnp.float32),
        grid_spec=pltpu.PrefetchScalarGridSpec(
            num_scalar_prefetch=0,
            grid=grid,
            in_specs=[
                pl.BlockSpec((tm, D), lambda i: (i, 0)),                # x rows
                pl.BlockSpec((D, D), lambda i: (0, 0), **single_buf),   # W1
                pl.BlockSpec((1, D), lambda i: (0, 0), **single_buf),   # b1
                pl.BlockSpec((1, D), lambda i: (0, 0), **single_buf),   # w2 row
                pl.BlockSpec((1, 1), lambda i: (0, 0), **single_buf),   # b2
            ],
            out_specs=pl.BlockSpec((tm, 1), lambda i: (i, 0)),
        ),
        compiler_params=pltpu.CompilerParams(
            dimension_semantics=("parallel",),
            vmem_limit_bytes=vmem_limit,
        ),
        cost_estimate=cost,
    )(x2d, w1c, b1_2d, w2_row, b2_2d)

    if n_pad != N:
        out = out[:N]
    return out.reshape(B, S, 1).astype(x.dtype)


def _xavier_uniform(key, fan_out, fan_in, dtype=jnp.float32):
    # Matches torch.nn.init.xavier_uniform_ on a (fan_out, fan_in) weight.
    bound = math.sqrt(6.0 / (fan_in + fan_out))
    return jax.random.uniform(
        key, (fan_out, fan_in), dtype=dtype, minval=-bound, maxval=bound
    )


def init_attention_params(key, feature_dim):
    k1, k2 = jax.random.split(key)
    # PyTorch Linear stores weight as (out_features, in_features); transpose
    # attn_1 to (in, out) for the kernel's row-major matmul, keep attn_2 as a
    # length-D vector.
    w1_pt = _xavier_uniform(k1, feature_dim, feature_dim)   # attn_1.weight
    w2_pt = _xavier_uniform(k2, 1, feature_dim)              # attn_2.weight
    b1 = jnp.zeros((feature_dim,), jnp.float32)               # attn_1.bias = 0
    b2 = jnp.zeros((1,), jnp.float32)                          # attn_2.bias = 0
    return w1_pt.T, b1, w2_pt.reshape(-1), b2


if __name__ == "__main__":
    key = jax.random.PRNGKey(0)
    k_x, k_p = jax.random.split(key)

    B, S, D = 2, 8, 32
    x = jax.random.normal(k_x, (B, S, D), dtype=jnp.float32)
    w1, b1, w2, b2 = init_attention_params(k_p, D)

    out = attention_forward(x, w1, b1, w2, b2)
    jax.block_until_ready(out)
    assert out.shape == (B, S, 1), out.shape

    # Reference 1: plain JAX mirroring the kernel's mixed precision
    # (bf16 MXU inputs, f32 accumulate / bias / tanh / projection).
    cdt = jnp.bfloat16
    h_ref = jnp.tanh(
        jnp.dot(x.astype(cdt), w1.astype(cdt), preferred_element_type=jnp.float32)
        + b1
    )
    ref_mixed = jnp.sum(h_ref * w2.reshape(1, 1, D), axis=-1, keepdims=True) + b2
    assert jnp.allclose(out, ref_mixed, atol=1e-3, rtol=1e-3), float(
        jnp.max(jnp.abs(out - ref_mixed))
    )

    # Reference 2: full-f32 semantics of the original module (bf16 tolerance).
    ref_f32 = jnp.tanh(x @ w1 + b1) @ w2.reshape(D, 1) + b2
    assert jnp.allclose(out, ref_f32, atol=3e-2, rtol=3e-2), float(
        jnp.max(jnp.abs(out - ref_f32))
    )

    print("KERNEL_OK")
</pallas_src>

<mosaic_0001>
module attributes {stable_mosaic.version = 11 : i64} {
  func.func @_attention_kernel(%arg0: i32, %arg1: memref<16x32xbf16, #tpu.memory_space<vmem>>, %arg2: memref<32x32xbf16, #tpu.memory_space<vmem>>, %arg3: memref<1x32xf32, #tpu.memory_space<vmem>>, %arg4: memref<1x32xf32, #tpu.memory_space<vmem>>, %arg5: memref<1x1xf32, #tpu.memory_space<vmem>>, %arg6: memref<16x1xf32, #tpu.memory_space<vmem>>) attributes {dimension_semantics = [#tpu.dimension_semantics<parallel>], iteration_bounds = array<i64: 1>, scalar_prefetch = 0 : i64, scratch_operands = 0 : i64, tpu.core_type = #tpu.core_type<tc>, window_params = [{transform_indices = @transform_0, window_bounds = array<i64: 16, 32>}, {pipeline_mode = #tpu.pipeline_mode<synchronous>, transform_indices = @transform_1, window_bounds = array<i64: 32, 32>}, {pipeline_mode = #tpu.pipeline_mode<synchronous>, transform_indices = @transform_2, window_bounds = array<i64: 1, 32>}, {pipeline_mode = #tpu.pipeline_mode<synchronous>, transform_indices = @transform_3, window_bounds = array<i64: 1, 32>}, {pipeline_mode = #tpu.pipeline_mode<synchronous>, transform_indices = @transform_4, window_bounds = array<i64: 1, 1>}, {transform_indices = @transform_5, window_bounds = array<i64: 16, 1>}]} {
    %c0 = arith.constant 0 : index
    %c0_0 = arith.constant 0 : index
    %0 = vector.load %arg1[%c0, %c0_0] : memref<16x32xbf16, #tpu.memory_space<vmem>>, vector<16x32xbf16>
    %c0_1 = arith.constant 0 : index
    %c0_2 = arith.constant 0 : index
    %1 = vector.load %arg2[%c0_1, %c0_2] : memref<32x32xbf16, #tpu.memory_space<vmem>>, vector<32x32xbf16>
    %cst = arith.constant dense<0.000000e+00> : vector<16x32xf32>
    %2 = tpu.matmul %0, %1, %cst {dimension_numbers = #tpu.dot_dimension_numbers<[1], [0], [0], [1], [0, 0, 1, 1], [], []>} : vector<16x32xbf16>, vector<32x32xbf16>, vector<16x32xf32> -> vector<16x32xf32>
    %c0_3 = arith.constant 0 : index
    %c0_4 = arith.constant 0 : index
    %3 = vector.load %arg3[%c0_3, %c0_4] : memref<1x32xf32, #tpu.memory_space<vmem>>, vector<1x32xf32>
    %4 = vector.broadcast %3 : vector<1x32xf32> to vector<16x32xf32>
    %5 = arith.addf %2, %4 : vector<16x32xf32>
    %6 = math.tanh %5 : vector<16x32xf32>
    %c0_5 = arith.constant 0 : index
    %c0_6 = arith.constant 0 : index
    %7 = vector.load %arg4[%c0_5, %c0_6] : memref<1x32xf32, #tpu.memory_space<vmem>>, vector<1x32xf32>
    %8 = vector.broadcast %7 : vector<1x32xf32> to vector<16x32xf32>
    %9 = arith.mulf %6, %8 : vector<16x32xf32>
    %cst_7 = arith.constant dense<0.000000e+00> : vector<16xf32>
    %10 = vector.multi_reduction <add>, %9, %cst_7 [1] : vector<16x32xf32> to vector<16xf32>
    %11 = vector.shape_cast %10 : vector<16xf32> to vector<16x1xf32>
    %c0_8 = arith.constant 0 : index
    %c0_9 = arith.constant 0 : index
    %12 = vector.load %arg5[%c0_8, %c0_9] : memref<1x1xf32, #tpu.memory_space<vmem>>, vector<1x1xf32>
    %13 = vector.broadcast %12 : vector<1x1xf32> to vector<16x1xf32>
    %14 = arith.addf %11, %13 : vector<16x1xf32>
    %c0_10 = arith.constant 0 : index
    %c0_11 = arith.constant 0 : index
    %15 = vector.load %arg6[%c0_10, %c0_11] : memref<16x1xf32, #tpu.memory_space<vmem>>, vector<16x1xf32>
    tpu.vector_store %arg6[%c0_10, %c0_11], %14 {strides = array<i32>} : memref<16x1xf32, #tpu.memory_space<vmem>>, vector<16x1xf32>,
    return
  }
  func.func @transform_0(%arg0: i32) -> (i32, i32) {
    %c0_i32 = arith.constant 0 : i32
    %c0_i32_0 = arith.constant 0 : i32
    return %arg0, %c0_i32 : i32, i32
  }
  func.func @transform_1(%arg0: i32) -> (i32, i32) {
    %c0_i32 = arith.constant 0 : i32
    %c0_i32_0 = arith.constant 0 : i32
    %c0_i32_1 = arith.constant 0 : i32
    return %c0_i32, %c0_i32_0 : i32, i32
  }
  func.func @transform_2(%arg0: i32) -> (i32, i32) {
    %c0_i32 = arith.constant 0 : i32
    %c0_i32_0 = arith.constant 0 : i32
    %c0_i32_1 = arith.constant 0 : i32
    return %c0_i32, %c0_i32_0 : i32, i32
  }
  func.func @transform_3(%arg0: i32) -> (i32, i32) {
    %c0_i32 = arith.constant 0 : i32
    %c0_i32_0 = arith.constant 0 : i32
    %c0_i32_1 = arith.constant 0 : i32
    return %c0_i32, %c0_i32_0 : i32, i32
  }
  func.func @transform_4(%arg0: i32) -> (i32, i32) {
    %c0_i32 = arith.constant 0 : i32
    %c0_i32_0 = arith.constant 0 : i32
    %c0_i32_1 = arith.constant 0 : i32
    return %c0_i32, %c0_i32_0 : i32, i32
  }
  func.func @transform_5(%arg0: i32) -> (i32, i32) {
    %c0_i32 = arith.constant 0 : i32
    %c0_i32_0 = arith.constant 0 : i32
    return %arg0, %c0_i32 : i32, i32
  }
}

</mosaic_0001>

<llo_original>
// kernel: attention_forward.1
$region0: #{attention_forward.1}
  #allocation0 [shape = 'u32[]', space=smem, size = 0x4, offset = 0x4, fixed_abs, tag = 'smem constant byte address 0x4 - core index']
  #allocation1 [shape = 'u32[144,128]{1,0:T(1,128)}', space=vmem, size = 0x12000, scoped, tag = 'internal scratch']
  #allocation2 [shape = 'f32[1,1]{1,0:T(1,128)S(1)}', space=vmem, size = 0x200, scoped, tag = 'scoped memory for attention_forward.1']
  %s0 = inlined_call_operand.vmem [shape: bf16[16,32], index: 0, kind: input, shape index: {}]
  %s1 = inlined_call_operand.vmem [shape: bf16[32,32], index: 1, kind: input, shape index: {}]
  %s2 = inlined_call_operand.vmem [shape: f32[1,32], index: 2, kind: input, shape index: {}]
  %s3 = inlined_call_operand.vmem [shape: f32[1,32], index: 3, kind: input, shape index: {}]
  %s4 = inlined_call_operand.<no memory space> [shape: f32[1,1], index: 4, kind: input, shape index: {}]
  %s5 = inlined_call_operand.vmem [shape: f32[16,1], index: 5, kind: output, shape index: {}]
  %s6 = sld [smem:[#allocation0]]
  $region30: #{attention_forward.1} parent=0
    _
  %s8 = ssub.s32 1, %s6
  %s9 = scalar_select 0, %s8, %s6
  %v10 = vstv %s4
  %11 = vst [vmem:[#allocation2] sm:$0x1] %v10
  // Predicated region
  $region2: #{attention_forward.1} parent=0 // pred_check
    _
  $region3: #{attention_forward.1} parent=0 // pred_check_branch
    %13 = sbr.rel (0) target = $region5
  $region4: #{attention_forward.1} parent=0 // pred_region
    _
  $region5: #{attention_forward.1} parent=0 // pred_fallthru
    _
  // Predicated region
  $region6: #{attention_forward.1} parent=0 // pred_check
    _
  $region7: #{attention_forward.1} parent=0 // pred_check_branch
    %15 = sbr.rel (0) target = $region9
  $region8: #{attention_forward.1} parent=0 // pred_region
    _
  $region9: #{attention_forward.1} parent=0 // pred_fallthru
    _
  // Predicated region
  $region10: #{attention_forward.1} parent=0 // pred_check
    _
  $region11: #{attention_forward.1} parent=0 // pred_check_branch
    %17 = sbr.rel (0) target = $region13
  $region12: #{attention_forward.1} parent=0 // pred_region
    _
  $region13: #{attention_forward.1} parent=0 // pred_fallthru
    _
  // Predicated region
  $region14: #{attention_forward.1} parent=0 // pred_check
    _
  $region15: #{attention_forward.1} parent=0 // pred_check_branch
    %19 = sbr.rel (0) target = $region17
  $region16: #{attention_forward.1} parent=0 // pred_region
    _
  $region17: #{attention_forward.1} parent=0 // pred_fallthru
    _
  // Predicated region
  $region18: #{attention_forward.1} parent=0 // pred_check
    _
  $region19: #{attention_forward.1} parent=0 // pred_check_branch
    %21 = sbr.rel (0) target = $region21
  $region20: #{attention_forward.1} parent=0 // pred_region
    _
  $region21: #{attention_forward.1} parent=0 // pred_fallthru
    _
  %v23 = vld [vmem:[%s0] sm:$0xf]
  %v24 = vld [vmem:[%s0 + $0x4] sm:$0xf]
  %v25 = vld [vmem:[%s1] sm:$0xf]
  %v26 = vld [vmem:[%s1 + $0x4] sm:$0xf]
  %v27 = vld [vmem:[%s1 + $0x8] sm:$0xf]
  %v28 = vld [vmem:[%s1 + $0xc] sm:$0xf]
  %v29 = vld [vmem:[%s2] sm:$0x1]
  %v31 = vlaneseq
  %v32 = vshrl.u32 %v31, 7
  %v33 = vsub.s32 0, %v32
  %v34 = vrot.slane %v29, %v33
  %v38 = vunpack.c.l.b16 %v23
  %v39 = vunpack.c.l.b16 %v24
  %v40 = vpack.c.b16 %v39, %v38
  %v45 = vunpack.c.l.b16 %v25
  %v46 = vunpack.c.l.b16 %v26
  %v47 = vunpack.c.l.b16 %v27
  %v48 = vunpack.c.l.b16 %v28
  %v49 = vpack.c.b16 %v46, %v45
  %v50 = vpack.c.b16 %v48, %v47
  %vm53 = vcmask 261120
  %v55 = vsel %vm53, %v40, 0
  %57 = vmatprep.subr.bf16.mxu0 0
  %58 = vmatpush1.bf16.msra.mxu0 %v49
  %59 = vmatprep.subr.bf16.mxu0 0
  %60 = vmatpush1.bf16.msra.mxu0 %v50
  %61 = vmatprep.subr.bf16.mxu0 0
  %62 = vmatpush1.bf16.msra.mxu0 0
  %63 = vmatprep.subr.bf16.mxu0 0
  %64 = vmatpush1.bf16.msra.mxu0 0
  %65 = vmatprep.subr.bf16.mxu0 0
  %66 = vmatpush1.bf16.msra.mxu0 0
  %67 = vmatprep.subr.bf16.mxu0 0
  %68 = vmatpush1.bf16.msra.mxu0 0
  %69 = vmatprep.subr.bf16.mxu0 0
  %70 = vmatpush1.bf16.msra.mxu0 0
  %71 = vmatprep.subr.bf16.mxu0 0
  %72 = vmatpush1.bf16.msra.mxu0 0
  %73 = vmatprep.subr.bf16.mxu0 0
  %74 = vmatpush1.bf16.msra.mxu0 0
  %75 = vmatprep.subr.bf16.mxu0 0
  %76 = vmatpush1.bf16.msra.mxu0 0
  %77 = vmatprep.subr.bf16.mxu0 0
  %78 = vmatpush1.bf16.msra.mxu0 0
  %79 = vmatprep.subr.bf16.mxu0 0
  %80 = vmatpush1.bf16.msra.mxu0 0
  %81 = vmatprep.subr.bf16.mxu0 0
  %82 = vmatpush1.bf16.msra.mxu0 0
  %83 = vmatprep.subr.bf16.mxu0 0
  %84 = vmatpush1.bf16.msra.mxu0 0
  %85 = vmatprep.subr.bf16.mxu0 0
  %86 = vmatpush1.bf16.msra.mxu0 0
  %87 = vmatprep.subr.bf16.mxu0 0
  %88 = vmatpush1.bf16.msra.mxu0 0
  %89 = vmatprep.mubr.bf16.mxu0 0
  %90 = vmatmul.mubr.bf16.gmra.mrb[0].mxu0 %v55
  %v91 = vpop.f32.mrb[0].mxu0
  %v92 = vadd.f32 %v34, %v91
  %v93 = vpop.f32.mrb[0].mxu0
  %v94 = vpop.f32.mrb[0].mxu0
  %v95 = vadd.f32 %v34, %v94
  %v96 = vpop.f32.mrb[0].mxu0
  %97 = vdwg.mxu0
  %v98 = vtanh.pop %v92
  %v99 = vtanh.pop %v95
  %v100 = vld [vmem:[%s3] sm:$0x1]
  %v102 = vlaneseq
  %v103 = vshrl.u32 %v102, 7
  %v104 = vsub.s32 0, %v103
  %v105 = vrot.slane %v100, %v104
  %v107 = vmul.f32 %v98, %v105
  %v108 = vmul.f32 %v99, %v105
  %v109 = vsel %vm53, %v107, 0.0
  %110 = vadd.xlane.f32.xlu0 %v109
  %v111 = vpop.xlane.xlu0 %110
  %v112 = vsel %vm53, %v108, 0.0
  %113 = vadd.xlane.f32.xlu0 %v112
  %v114 = vpop.xlane.xlu0 %113
  %v115 = vld [vmem:[#allocation2] sm:$0x1]
  %v117 = vlaneseq
  %v118 = vshrl.u32 %v117, 7
  %v119 = vsub.s32 0, %v118
  %v120 = vrot.slane %v115, %v119
  %v122 = vadd.f32 %v111, %v120
  %v123 = vadd.f32 %v114, %v120
  %vm124 = vcmask 7168
  %125 = vst.msk [vmem:[%s5] sm:$0xff] %vm124, %v122
  %126 = vst.msk [vmem:[%s5 + $0x8] sm:$0xff] %vm124, %v123
  // Predicated region
  $region22: #{attention_forward.1} parent=0 // pred_check
    _
  $region23: #{attention_forward.1} parent=0 // pred_check_branch
    %128 = sbr.rel (0) target = $region25
  $region24: #{attention_forward.1} parent=0 // pred_region
    _
  $region25: #{attention_forward.1} parent=0 // pred_fallthru
    _
  // Predicated region
  $region26: #{attention_forward.1} parent=0 // pred_check
    _
  $region27: #{attention_forward.1} parent=0 // pred_check_branch
    %130 = sbr.rel (0) target = $region29
  $region28: #{attention_forward.1} parent=0 // pred_region
    _
  $region29: #{attention_forward.1} parent=0 // pred_fallthru
    _

</llo_original>
